<compile_context>
chip_gen: v7x
topology: tpu7x:2x2x1
jax: 0.10.0
libtpu: 0.0.40
codegen_flags: <defaults>
</compile_context>

<pallas_src>
import jax
import jax.numpy as jnp
from jax.experimental import pallas as pl
from jax.experimental.pallas import tpu as pltpu


# ---------------------------------------------------------------------------
# Kernel: fused 3-layer MLP (2 dots for layer 1 since the concat is eliminated)
# ---------------------------------------------------------------------------
def generator_kernel(noise_ref, cond_ref,
                     w1n_ref, w1c_ref, b1_ref,
                     w2_ref, b2_ref,
                     w3_ref, b3_ref,
                     out_ref):
    bf16 = jnp.bfloat16

    # Layer 1: Linear(in -> 128) + ReLU, expressed as split dot (no concat).
    xn = noise_ref[...].astype(bf16)
    xc = cond_ref[...].astype(bf16)
    h1 = (jnp.dot(xn, w1n_ref[...], preferred_element_type=jnp.float32)
          + jnp.dot(xc, w1c_ref[...], preferred_element_type=jnp.float32)
          + b1_ref[...])
    h1 = jnp.maximum(h1, 0.0)                                   # f32 VPU

    # Layer 2: Linear(128 -> 256) + ReLU
    h2 = jnp.dot(h1.astype(bf16), w2_ref[...],
                 preferred_element_type=jnp.float32) + b2_ref[...]
    h2 = jnp.maximum(h2, 0.0)

    # Layer 3: Linear(256 -> out_pad) + Tanh (out_pad is lane-dense, padded cols
    # have zero weights/bias so they produce tanh(0)=0 and are sliced off later).
    h3 = jnp.dot(h2.astype(bf16), w3_ref[...],
                 preferred_element_type=jnp.float32) + b3_ref[...]
    out_ref[...] = jnp.tanh(h3).astype(out_ref.dtype)


# ---------------------------------------------------------------------------
# Wrapper
# ---------------------------------------------------------------------------
def _round_up(x, m):
    return ((x + m - 1) // m) * m


def generator_forward(noise, cond, kernel_params, out_dim, *, block_batch=512):
    """Runs the fused Generator MLP as a single Pallas kernel.

    kernel_params: (w1n, w1c, b1, w2, b2, w3_pad, b3_pad) — bf16 weights,
    f32 biases, w3/b3 padded to a multiple of 128 output lanes.
    """
    w1n, w1c, b1, w2, b2, w3p, b3p = kernel_params
    batch = noise.shape[0]
    noise_dim = noise.shape[1]
    cond_dim = cond.shape[1]
    out_pad = w3p.shape[1]  # multiple of 128 -> lane-dense stores

    # Pick a batch tile: whole (sublane-rounded) batch if small, else block_batch.
    if batch <= block_batch:
        tb = _round_up(batch, 8)
        padded_batch = tb
    else:
        tb = block_batch
        padded_batch = _round_up(batch, tb)

    if padded_batch != batch:
        noise = jnp.pad(noise, ((0, padded_batch - batch), (0, 0)))
        cond = jnp.pad(cond, ((0, padded_batch - batch), (0, 0)))

    grid = (padded_batch // tb,)

    def resident(a):  # weight/bias stays in VMEM across all batch tiles
        nd = a.ndim
        return pl.BlockSpec(a.shape, lambda i: (0,) * nd)

    out = pl.pallas_call(
        generator_kernel,
        out_shape=jax.ShapeDtypeStruct((padded_batch, out_pad), jnp.float32),
        grid=grid,
        in_specs=[
            pl.BlockSpec((tb, noise_dim), lambda i: (i, 0)),
            pl.BlockSpec((tb, cond_dim), lambda i: (i, 0)),
            resident(w1n), resident(w1c), resident(b1),
            resident(w2), resident(b2),
            resident(w3p), resident(b3p),
        ],
        out_specs=pl.BlockSpec((tb, out_pad), lambda i: (i, 0)),
        compiler_params=pltpu.CompilerParams(
            dimension_semantics=("parallel",)),
    )(noise, cond, w1n, w1c, b1, w2, b2, w3p, b3p)

    return out[:batch, :out_dim]


# ---------------------------------------------------------------------------
# Parameter construction
# ---------------------------------------------------------------------------
def init_generator_params(key, noise_dim, cond_dim, out_dim):
    """Deterministic synthetic init matching the nn.Linear shapes.

    PyTorch stores Linear weights as (out, in); we keep (in, out) so the kernel
    does x @ W directly (identical math)."""
    in_dim = noise_dim + cond_dim
    k1, k2, k3, k4, k5, k6 = jax.random.split(key, 6)
    scale = 0.1
    w1 = jax.random.normal(k1, (in_dim, 128), jnp.float32) * scale
    b1 = jax.random.normal(k2, (1, 128), jnp.float32) * scale
    w2 = jax.random.normal(k3, (128, 256), jnp.float32) * scale
    b2 = jax.random.normal(k4, (1, 256), jnp.float32) * scale
    w3 = jax.random.normal(k5, (256, out_dim), jnp.float32) * scale
    b3 = jax.random.normal(k6, (1, out_dim), jnp.float32) * scale
    return (w1, b1, w2, b2, w3, b3)


def prepare_kernel_params(params, noise_dim, out_dim):
    """Split w1 (no concat), cast weights to bf16 (MXU fast path, half DMA),
    pad the last layer to 128 output lanes (lane-dense stores)."""
    w1, b1, w2, b2, w3, b3 = params
    out_pad = max(128, _round_up(out_dim, 128))

    w1n = w1[:noise_dim, :].astype(jnp.bfloat16)
    w1c = w1[noise_dim:, :].astype(jnp.bfloat16)
    w2b = w2.astype(jnp.bfloat16)
    w3p = jnp.pad(w3, ((0, 0), (0, out_pad - out_dim))).astype(jnp.bfloat16)
    b3p = jnp.pad(b3, ((0, 0), (0, out_pad - out_dim)))  # f32
    return (w1n, w1c, b1, w2b, b2, w3p, b3p)


# ---------------------------------------------------------------------------
# Pure-JAX reference (mirrors the kernel's bf16-matmul / f32-accumulate math)
# ---------------------------------------------------------------------------
def reference_forward(noise, cond, params):
    w1, b1, w2, b2, w3, b3 = params
    bf16 = jnp.bfloat16
    x = jnp.concatenate([noise, cond], axis=1)
    h = jnp.maximum(jnp.dot(x.astype(bf16), w1.astype(bf16),
                            preferred_element_type=jnp.float32) + b1, 0.0)
    h = jnp.maximum(jnp.dot(h.astype(bf16), w2.astype(bf16),
                            preferred_element_type=jnp.float32) + b2, 0.0)
    return jnp.tanh(jnp.dot(h.astype(bf16), w3.astype(bf16),
                            preferred_element_type=jnp.float32) + b3)


if __name__ == "__main__":
    # Small shapes consistent with the module: noise_dim=32,
    # cond_dim = onehot(2 categorical cols)+1 -> 8, out_dim = #numeric cols -> 16.
    batch, noise_dim, cond_dim, out_dim = 8, 32, 8, 16

    key = jax.random.PRNGKey(0)
    k_noise, k_cond, k_params = jax.random.split(key, 3)

    noise = jax.random.normal(k_noise, (batch, noise_dim), jnp.float32)
    # cond ~ one-hot-ish conditioning vector + extra column; {0,1} values are fine
    cond = (jax.random.uniform(k_cond, (batch, cond_dim), jnp.float32)
            > 0.5).astype(jnp.float32)

    params = init_generator_params(k_params, noise_dim, cond_dim, out_dim)
    kparams = prepare_kernel_params(params, noise_dim, out_dim)

    out = generator_forward(noise, cond, kparams, out_dim)
    out = jax.block_until_ready(out)

    ref = reference_forward(noise, cond, params)
    assert out.shape == (batch, out_dim)
    assert jnp.allclose(out, ref, atol=1e-3, rtol=1e-3), \
        "Pallas output mismatch vs reference"

    print("KERNEL_OK")
</pallas_src>

<mosaic_0001>
module attributes {stable_mosaic.version = 11 : i64} {
  func.func @generator_kernel(%arg0: i32, %arg1: memref<8x32xf32, #tpu.memory_space<vmem>>, %arg2: memref<8x8xf32, #tpu.memory_space<vmem>>, %arg3: memref<32x128xbf16, #tpu.memory_space<vmem>>, %arg4: memref<8x128xbf16, #tpu.memory_space<vmem>>, %arg5: memref<1x128xf32, #tpu.memory_space<vmem>>, %arg6: memref<128x256xbf16, #tpu.memory_space<vmem>>, %arg7: memref<1x256xf32, #tpu.memory_space<vmem>>, %arg8: memref<256x128xbf16, #tpu.memory_space<vmem>>, %arg9: memref<1x128xf32, #tpu.memory_space<vmem>>, %arg10: memref<8x128xf32, #tpu.memory_space<vmem>>) attributes {dimension_semantics = [#tpu.dimension_semantics<parallel>], iteration_bounds = array<i64: 1>, scalar_prefetch = 0 : i64, scratch_operands = 0 : i64, tpu.core_type = #tpu.core_type<tc>, window_params = [{transform_indices = @transform_0, window_bounds = array<i64: 8, 32>}, {transform_indices = @transform_1, window_bounds = array<i64: 8, 8>}, {pipeline_mode = #tpu.pipeline_mode<synchronous>, transform_indices = @transform_2, window_bounds = array<i64: 32, 128>}, {pipeline_mode = #tpu.pipeline_mode<synchronous>, transform_indices = @transform_3, window_bounds = array<i64: 8, 128>}, {pipeline_mode = #tpu.pipeline_mode<synchronous>, transform_indices = @transform_4, window_bounds = array<i64: 1, 128>}, {pipeline_mode = #tpu.pipeline_mode<synchronous>, transform_indices = @transform_5, window_bounds = array<i64: 128, 256>}, {pipeline_mode = #tpu.pipeline_mode<synchronous>, transform_indices = @transform_6, window_bounds = array<i64: 1, 256>}, {pipeline_mode = #tpu.pipeline_mode<synchronous>, transform_indices = @transform_7, window_bounds = array<i64: 256, 128>}, {pipeline_mode = #tpu.pipeline_mode<synchronous>, transform_indices = @transform_8, window_bounds = array<i64: 1, 128>}, {transform_indices = @transform_9, window_bounds = array<i64: 8, 128>}]} {
    %c0 = arith.constant 0 : index
    %c0_0 = arith.constant 0 : index
    %0 = vector.load %arg1[%c0, %c0_0] : memref<8x32xf32, #tpu.memory_space<vmem>>, vector<8x32xf32>
    %1 = arith.truncf %0 : vector<8x32xf32> to vector<8x32xbf16>
    %c0_1 = arith.constant 0 : index
    %c0_2 = arith.constant 0 : index
    %2 = vector.load %arg2[%c0_1, %c0_2] : memref<8x8xf32, #tpu.memory_space<vmem>>, vector<8x8xf32>
    %3 = arith.truncf %2 : vector<8x8xf32> to vector<8x8xbf16>
    %c0_3 = arith.constant 0 : index
    %c0_4 = arith.constant 0 : index
    %4 = vector.load %arg3[%c0_3, %c0_4] : memref<32x128xbf16, #tpu.memory_space<vmem>>, vector<32x128xbf16>
    %cst = arith.constant dense<0.000000e+00> : vector<8x128xf32>
    %5 = tpu.matmul %1, %4, %cst {dimension_numbers = #tpu.dot_dimension_numbers<[1], [0], [0], [1], [0, 0, 1, 1], [], []>} : vector<8x32xbf16>, vector<32x128xbf16>, vector<8x128xf32> -> vector<8x128xf32>
    %c0_5 = arith.constant 0 : index
    %c0_6 = arith.constant 0 : index
    %6 = vector.load %arg4[%c0_5, %c0_6] : memref<8x128xbf16, #tpu.memory_space<vmem>>, vector<8x128xbf16>
    %cst_7 = arith.constant dense<0.000000e+00> : vector<8x128xf32>
    %7 = tpu.matmul %3, %6, %cst_7 {dimension_numbers = #tpu.dot_dimension_numbers<[1], [0], [0], [1], [0, 0, 1, 1], [], []>} : vector<8x8xbf16>, vector<8x128xbf16>, vector<8x128xf32> -> vector<8x128xf32>
    %8 = arith.addf %5, %7 : vector<8x128xf32>
    %c0_8 = arith.constant 0 : index
    %c0_9 = arith.constant 0 : index
    %9 = vector.load %arg5[%c0_8, %c0_9] : memref<1x128xf32, #tpu.memory_space<vmem>>, vector<1x128xf32>
    %10 = vector.broadcast %9 : vector<1x128xf32> to vector<8x128xf32>
    %11 = arith.addf %8, %10 : vector<8x128xf32>
    %cst_10 = arith.constant 0.000000e+00 : f32
    %12 = vector.broadcast %cst_10 : f32 to vector<8x128xf32>
    %13 = arith.maximumf %11, %12 : vector<8x128xf32>
    %14 = arith.truncf %13 : vector<8x128xf32> to vector<8x128xbf16>
    %c0_11 = arith.constant 0 : index
    %c0_12 = arith.constant 0 : index
    %15 = vector.load %arg6[%c0_11, %c0_12] : memref<128x256xbf16, #tpu.memory_space<vmem>>, vector<128x256xbf16>
    %cst_13 = arith.constant dense<0.000000e+00> : vector<8x256xf32>
    %16 = tpu.matmul %14, %15, %cst_13 {dimension_numbers = #tpu.dot_dimension_numbers<[1], [0], [0], [1], [0, 0, 1, 1], [], []>} : vector<8x128xbf16>, vector<128x256xbf16>, vector<8x256xf32> -> vector<8x256xf32>
    %c0_14 = arith.constant 0 : index
    %c0_15 = arith.constant 0 : index
    %17 = vector.load %arg7[%c0_14, %c0_15] : memref<1x256xf32, #tpu.memory_space<vmem>>, vector<1x256xf32>
    %18 = vector.broadcast %17 : vector<1x256xf32> to vector<8x256xf32>
    %19 = arith.addf %16, %18 : vector<8x256xf32>
    %cst_16 = arith.constant 0.000000e+00 : f32
    %20 = vector.broadcast %cst_16 : f32 to vector<8x256xf32>
    %21 = arith.maximumf %19, %20 : vector<8x256xf32>
    %22 = arith.truncf %21 : vector<8x256xf32> to vector<8x256xbf16>
    %c0_17 = arith.constant 0 : index
    %c0_18 = arith.constant 0 : index
    %23 = vector.load %arg8[%c0_17, %c0_18] : memref<256x128xbf16, #tpu.memory_space<vmem>>, vector<256x128xbf16>
    %cst_19 = arith.constant dense<0.000000e+00> : vector<8x128xf32>
    %24 = tpu.matmul %22, %23, %cst_19 {dimension_numbers = #tpu.dot_dimension_numbers<[1], [0], [0], [1], [0, 0, 1, 1], [], []>} : vector<8x256xbf16>, vector<256x128xbf16>, vector<8x128xf32> -> vector<8x128xf32>
    %c0_20 = arith.constant 0 : index
    %c0_21 = arith.constant 0 : index
    %25 = vector.load %arg9[%c0_20, %c0_21] : memref<1x128xf32, #tpu.memory_space<vmem>>, vector<1x128xf32>
    %26 = vector.broadcast %25 : vector<1x128xf32> to vector<8x128xf32>
    %27 = arith.addf %24, %26 : vector<8x128xf32>
    %28 = math.tanh %27 : vector<8x128xf32>
    %c0_22 = arith.constant 0 : index
    %c0_23 = arith.constant 0 : index
    %29 = vector.load %arg10[%c0_22, %c0_23] : memref<8x128xf32, #tpu.memory_space<vmem>>, vector<8x128xf32>
    tpu.vector_store %arg10[%c0_22, %c0_23], %28 {strides = array<i32>} : memref<8x128xf32, #tpu.memory_space<vmem>>, vector<8x128xf32>,
    return
  }
  func.func @transform_0(%arg0: i32) -> (i32, i32) {
    %c0_i32 = arith.constant 0 : i32
    %c0_i32_0 = arith.constant 0 : i32
    return %arg0, %c0_i32 : i32, i32
  }
  func.func @transform_1(%arg0: i32) -> (i32, i32) {
    %c0_i32 = arith.constant 0 : i32
    %c0_i32_0 = arith.constant 0 : i32
    return %arg0, %c0_i32 : i32, i32
  }
  func.func @transform_2(%arg0: i32) -> (i32, i32) {
    %c0_i32 = arith.constant 0 : i32
    %c0_i32_0 = arith.constant 0 : i32
    %c0_i32_1 = arith.constant 0 : i32
    return %c0_i32, %c0_i32_0 : i32, i32
  }
  func.func @transform_3(%arg0: i32) -> (i32, i32) {
    %c0_i32 = arith.constant 0 : i32
    %c0_i32_0 = arith.constant 0 : i32
    %c0_i32_1 = arith.constant 0 : i32
    return %c0_i32, %c0_i32_0 : i32, i32
  }
  func.func @transform_4(%arg0: i32) -> (i32, i32) {
    %c0_i32 = arith.constant 0 : i32
    %c0_i32_0 = arith.constant 0 : i32
    %c0_i32_1 = arith.constant 0 : i32
    return %c0_i32, %c0_i32_0 : i32, i32
  }
  func.func @transform_5(%arg0: i32) -> (i32, i32) {
    %c0_i32 = arith.constant 0 : i32
    %c0_i32_0 = arith.constant 0 : i32
    %c0_i32_1 = arith.constant 0 : i32
    return %c0_i32, %c0_i32_0 : i32, i32
  }
  func.func @transform_6(%arg0: i32) -> (i32, i32) {
    %c0_i32 = arith.constant 0 : i32
    %c0_i32_0 = arith.constant 0 : i32
    %c0_i32_1 = arith.constant 0 : i32
    return %c0_i32, %c0_i32_0 : i32, i32
  }
  func.func @transform_7(%arg0: i32) -> (i32, i32) {
    %c0_i32 = arith.constant 0 : i32
    %c0_i32_0 = arith.constant 0 : i32
    %c0_i32_1 = arith.constant 0 : i32
    return %c0_i32, %c0_i32_0 : i32, i32
  }
  func.func @transform_8(%arg0: i32) -> (i32, i32) {
    %c0_i32 = arith.constant 0 : i32
    %c0_i32_0 = arith.constant 0 : i32
    %c0_i32_1 = arith.constant 0 : i32
    return %c0_i32, %c0_i32_0 : i32, i32
  }
  func.func @transform_9(%arg0: i32) -> (i32, i32) {
    %c0_i32 = arith.constant 0 : i32
    %c0_i32_0 = arith.constant 0 : i32
    return %arg0, %c0_i32 : i32, i32
  }
}

</mosaic_0001>

<llo_original>
// kernel: tpu_custom_call.1
$region0: #{tpu_custom_call.1}
  #allocation0 [shape = 'u32[]', space=smem, size = 0x4, offset = 0x4, fixed_abs, tag = 'smem constant byte address 0x4 - core index']
  #allocation1 [shape = 'u32[144,128]{1,0:T(1,128)}', space=vmem, size = 0x12000, scoped, tag = 'internal scratch']
  %s0 = inlined_call_operand.hbm [shape: f32[8,32], index: 0, kind: input, shape index: {}]
  %s1 = inlined_call_operand.hbm [shape: f32[8,8], index: 1, kind: input, shape index: {}]
  %s2 = inlined_call_operand.hbm [shape: bf16[32,128], index: 2, kind: input, shape index: {}]
  %s3 = inlined_call_operand.vmem [shape: bf16[8,128], index: 3, kind: input, shape index: {}]
  %s4 = inlined_call_operand.vmem [shape: f32[1,128], index: 4, kind: input, shape index: {}]
  %s5 = inlined_call_operand.hbm [shape: bf16[128,256], index: 5, kind: input, shape index: {}]
  %s6 = inlined_call_operand.vmem [shape: f32[1,256], index: 6, kind: input, shape index: {}]
  %s7 = inlined_call_operand.hbm [shape: bf16[256,128], index: 7, kind: input, shape index: {}]
  %s8 = inlined_call_operand.vmem [shape: f32[1,128], index: 8, kind: input, shape index: {}]
  %s9 = inlined_call_operand.hbm [shape: f32[8,128], index: 9, kind: output, shape index: {}]
  %s10 = sld [smem:[#allocation0]]
  $region66: #{tpu_custom_call.1} parent=0
    _
  %s12 = ssub.s32 1, %s10
  %s13 = scalar_select 0, %s12, %s10
  $region1: #{tpu_custom_call.1} parent=0
    #allocation2 [shape = 'u8[4096]{0}', space=vmem, size = 0x1000, scoped, tag = 'input window, operand 0, single buffered']
    #allocation3 [shape = 's32[1]{0}', space=sflag, size = 0x4, scoped, tag = 'scoped memory for tpu_custom_call.1']
    #allocation4 [shape = 's32[1]{0}', space=sflag, size = 0x4, scoped, tag = 'scoped memory for tpu_custom_call.1']
    #allocation5 [shape = 'u8[4096]{0}', space=vmem, size = 0x1000, scoped, tag = 'input window, operand 1, single buffered']
    #allocation6 [shape = 's32[1]{0}', space=sflag, size = 0x4, scoped, tag = 'scoped memory for tpu_custom_call.1']
    #allocation7 [shape = 'u8[8192]{0}', space=vmem, size = 0x2000, scoped, tag = 'input window, operand 2, single buffered']
    #allocation8 [shape = 'u8[65536]{0}', space=vmem, size = 0x10000, scoped, tag = 'input window, operand 5, single buffered']
    #allocation9 [shape = 's32[1]{0}', space=sflag, size = 0x4, scoped, tag = 'scoped memory for tpu_custom_call.1']
    #allocation10 [shape = 'u8[65536]{0}', space=vmem, size = 0x10000, scoped, tag = 'input window, operand 7, single buffered']
    #allocation11 [shape = 'u8[4096]{0}', space=vmem, size = 0x1000, scoped, tag = 'output window, operand 0, single buffered']
    %14 = vsyncpa [#allocation3], 0
    %15 = vsyncpa [#allocation6], 0
    %16 = vsyncpa [#allocation9], 0
    %17 = vsyncpa [#allocation4], 0
    // Predicated region
    $region2: #{tpu_custom_call.1} parent=1 // pred_check
      _
    $region3: #{tpu_custom_call.1} parent=1 // pred_check_branch
      %19 = sbr.rel (0) target = $region5
    $region4: #{tpu_custom_call.1} parent=1 // pred_region
      %s21 = ssub.s32 128, 128
      %22 = vsyncadd [#allocation3], %s21
      %s24 = sshll.u32 [#allocation2], 4
      %s25 = int_to_ptr.vmem [resolvable:$true] %s24
      %27 = dma.hbm_to_vmem [thread:$0]  %s0, 128, %s25, [#allocation3]
    $region5: #{tpu_custom_call.1} parent=1 // pred_fallthru
      _
    // Predicated region
    $region6: #{tpu_custom_call.1} parent=1 // pred_check
      _
    $region7: #{tpu_custom_call.1} parent=1 // pred_check_branch
      %29 = sbr.rel (0) target = $region9
    $region8: #{tpu_custom_call.1} parent=1 // pred_region
      %s31 = ssub.s32 128, 128
      %32 = vsyncadd [#allocation6], %s31
      %s34 = sshll.u32 [#allocation5], 4
      %s35 = int_to_ptr.vmem [resolvable:$true] %s34
      %37 = dma.hbm_to_vmem [thread:$0]  %s1, 128, %s35, [#allocation6]
    $region9: #{tpu_custom_call.1} parent=1 // pred_fallthru
      _
    // Predicated region
    $region10: #{tpu_custom_call.1} parent=1 // pred_check
      _
    $region11: #{tpu_custom_call.1} parent=1 // pred_check_branch
      %39 = sbr.rel (0) target = $region13
    $region12: #{tpu_custom_call.1} parent=1 // pred_region
      %s41 = ssub.s32 256, 256
      %42 = vsyncadd [#allocation6], %s41
      %s43 = sshll.u32 [#allocation7], 4
      %s44 = int_to_ptr.vmem [resolvable:$true] %s43
      %49 = dma.hbm_to_vmem [thread:$0]  %s2, 256, %s44, [#allocation6], 64, 64, 4
    $region13: #{tpu_custom_call.1} parent=1 // pred_fallthru
      _
    // Predicated region
    $region14: #{tpu_custom_call.1} parent=1 // pred_check
      _
    $region15: #{tpu_custom_call.1} parent=1 // pred_check_branch
      %51 = sbr.rel (0) target = $region17
    $region16: #{tpu_custom_call.1} parent=1 // pred_region
      _
    $region17: #{tpu_custom_call.1} parent=1 // pred_fallthru
      _
    // Predicated region
    $region18: #{tpu_custom_call.1} parent=1 // pred_check
      _
    $region19: #{tpu_custom_call.1} parent=1 // pred_check_branch
      %53 = sbr.rel (0) target = $region21
    $region20: #{tpu_custom_call.1} parent=1 // pred_region
      _
    $region21: #{tpu_custom_call.1} parent=1 // pred_fallthru
      _
    // Predicated region
    $region22: #{tpu_custom_call.1} parent=1 // pred_check
      _
    $region23: #{tpu_custom_call.1} parent=1 // pred_check_branch
      %55 = sbr.rel (0) target = $region25
    $region24: #{tpu_custom_call.1} parent=1 // pred_region
      %s57 = ssub.s32 2048, 2048
      %58 = vsyncadd [#allocation9], %s57
      %s59 = sshll.u32 [#allocation8], 4
      %s60 = int_to_ptr.vmem [resolvable:$true] %s59
      %65 = dma.hbm_to_vmem [thread:$0]  %s5, 2048, %s60, [#allocation9], 128, 128, 8
    $region25: #{tpu_custom_call.1} parent=1 // pred_fallthru
      _
    // Predicated region
    $region26: #{tpu_custom_call.1} parent=1 // pred_check
      _
    $region27: #{tpu_custom_call.1} parent=1 // pred_check_branch
      %67 = sbr.rel (0) target = $region29
    $region28: #{tpu_custom_call.1} parent=1 // pred_region
      _
    $region29: #{tpu_custom_call.1} parent=1 // pred_fallthru
      _
    // Predicated region
    $region30: #{tpu_custom_call.1} parent=1 // pred_check
      _
    $region31: #{tpu_custom_call.1} parent=1 // pred_check_branch
      %69 = sbr.rel (0) target = $region33
    $region32: #{tpu_custom_call.1} parent=1 // pred_region
      %s71 = ssub.s32 2048, 2048
      %72 = vsyncadd [#allocation9], %s71
      %s73 = sshll.u32 [#allocation10], 4
      %s74 = int_to_ptr.vmem [resolvable:$true] %s73
      %79 = dma.hbm_to_vmem [thread:$0]  %s7, 2048, %s74, [#allocation9], 64, 64, 4
    $region33: #{tpu_custom_call.1} parent=1 // pred_fallthru
      _
    // Predicated region
    $region34: #{tpu_custom_call.1} parent=1 // pred_check
      _
    $region35: #{tpu_custom_call.1} parent=1 // pred_check_branch
      %81 = sbr.rel (0) target = $region37
    $region36: #{tpu_custom_call.1} parent=1 // pred_region
      _
    $region37: #{tpu_custom_call.1} parent=1 // pred_fallthru
      _
    // Predicated region
    $region38: #{tpu_custom_call.1} parent=1 // pred_check
      _
    $region39: #{tpu_custom_call.1} parent=1 // pred_check_branch
      %83 = sbr.rel (0) target = $region41
    $region40: #{tpu_custom_call.1} parent=1 // pred_region
      %84 = dma.done [#allocation3], 128
    $region41: #{tpu_custom_call.1} parent=1 // pred_fallthru
      _
    // Predicated region
    $region42: #{tpu_custom_call.1} parent=1 // pred_check
      _
    $region43: #{tpu_custom_call.1} parent=1 // pred_check_branch
      %86 = sbr.rel (0) target = $region45
    $region44: #{tpu_custom_call.1} parent=1 // pred_region
      %87 = dma.done [#allocation6], 128
    $region45: #{tpu_custom_call.1} parent=1 // pred_fallthru
      _
    // Predicated region
    $region46: #{tpu_custom_call.1} parent=1 // pred_check
      _
    $region47: #{tpu_custom_call.1} parent=1 // pred_check_branch
      %89 = sbr.rel (0) target = $region49
    $region48: #{tpu_custom_call.1} parent=1 // pred_region
      %90 = dma.done [#allocation6], 256
    $region49: #{tpu_custom_call.1} parent=1 // pred_fallthru
      _
    // Predicated region
    $region50: #{tpu_custom_call.1} parent=1 // pred_check
      _
    $region51: #{tpu_custom_call.1} parent=1 // pred_check_branch
      %92 = sbr.rel (0) target = $region53
    $region52: #{tpu_custom_call.1} parent=1 // pred_region
      %93 = dma.done [#allocation9], 2048
    $region53: #{tpu_custom_call.1} parent=1 // pred_fallthru
      _
    // Predicated region
    $region54: #{tpu_custom_call.1} parent=1 // pred_check
      _
    $region55: #{tpu_custom_call.1} parent=1 // pred_check_branch
      %95 = sbr.rel (0) target = $region57
    $region56: #{tpu_custom_call.1} parent=1 // pred_region
      %96 = dma.done [#allocation9], 2048
    $region57: #{tpu_custom_call.1} parent=1 // pred_fallthru
      _
    %v98 = vld [vmem:[#allocation2] sm:$0xff]
    %v99 = vpack.c.bf16 %v98, %v98
    %v100 = vld [vmem:[#allocation5] sm:$0xff]
    %v101 = vpack.c.bf16 %v100, %v100
    %v102 = vld [vmem:[#allocation7] sm:$0xf]
    %v103 = vld [vmem:[#allocation7 + $0x4] sm:$0xf]
    %v104 = vld [vmem:[#allocation7 + $0x8] sm:$0xf]
    %v105 = vld [vmem:[#allocation7 + $0xc] sm:$0xf]
    %v106 = vld [vmem:[%s3] sm:$0xf]
    %vm107 = vcmask 64512
    %v109 = vsel %vm107, %v101, 0
    %vm111 = vcmask 1043456
    %v113 = vsel %vm111, %v106, 0
    %115 = vmatprep.subr.bf16.mxu0 0
    %116 = vmatpush1.bf16.msra.mxu0 %v113
    %117 = vmatprep.subr.bf16.mxu0 0
    %118 = vmatpush1.bf16.msra.mxu0 0
    %119 = vmatprep.subr.bf16.mxu0 0
    %120 = vmatpush1.bf16.msra.mxu0 0
    %121 = vmatprep.subr.bf16.mxu0 0
    %122 = vmatpush1.bf16.msra.mxu0 0
    %123 = vmatprep.subr.bf16.mxu0 0
    %124 = vmatpush1.bf16.msra.mxu0 0
    %125 = vmatprep.subr.bf16.mxu0 0
    %126 = vmatpush1.bf16.msra.mxu0 0
    %127 = vmatprep.subr.bf16.mxu0 0
    %128 = vmatpush1.bf16.msra.mxu0 0
    %129 = vmatprep.subr.bf16.mxu0 0
    %130 = vmatpush1.bf16.msra.mxu0 0
    %131 = vmatprep.subr.bf16.mxu0 0
    %132 = vmatpush1.bf16.msra.mxu0 0
    %133 = vmatprep.subr.bf16.mxu0 0
    %134 = vmatpush1.bf16.msra.mxu0 0
    %135 = vmatprep.subr.bf16.mxu0 0
    %136 = vmatpush1.bf16.msra.mxu0 0
    %137 = vmatprep.subr.bf16.mxu0 0
    %138 = vmatpush1.bf16.msra.mxu0 0
    %139 = vmatprep.subr.bf16.mxu0 0
    %140 = vmatpush1.bf16.msra.mxu0 0
    %141 = vmatprep.subr.bf16.mxu0 0
    %142 = vmatpush1.bf16.msra.mxu0 0
    %143 = vmatprep.subr.bf16.mxu0 0
    %144 = vmatpush1.bf16.msra.mxu0 0
    %145 = vmatprep.subr.bf16.mxu0 0
    %146 = vmatpush1.bf16.msra.mxu0 0
    %147 = vmatprep.mubr.bf16.mxu0 0
    %148 = vmatmul.mubr.bf16.gmra.mrb[0].mxu0 %v109
    %v149 = vpop.f32.mrb[0].mxu0
    %v150 = vadd.f32 0.0, %v149
    %v151 = vpop.f32.mrb[0].mxu0
    %v152 = vpop.f32.mrb[0].mxu0
    %v153 = vpop.f32.mrb[0].mxu0
    %154 = vdwg.mxu0
    %v159 = vunpack.c.l.b16 %v102
    %v160 = vunpack.c.l.b16 %v103
    %v161 = vunpack.c.l.b16 %v104
    %v162 = vunpack.c.l.b16 %v105
    %v163 = vpack.c.b16 %v160, %v159
    %v164 = vpack.c.b16 %v162, %v161
    %vm167 = vcmask 261120
    %v169 = vsel %vm167, %v99, 0
    %171 = vmatprep.subr.bf16.mxu0 0
    %172 = vmatpush1.bf16.msra.mxu0 %v163
    %173 = vmatprep.subr.bf16.mxu0 0
    %174 = vmatpush1.bf16.msra.mxu0 %v164
    %175 = vmatprep.subr.bf16.mxu0 0
    %176 = vmatpush1.bf16.msra.mxu0 0
    %177 = vmatprep.subr.bf16.mxu0 0
    %178 = vmatpush1.bf16.msra.mxu0 0
    %179 = vmatprep.subr.bf16.mxu0 0
    %180 = vmatpush1.bf16.msra.mxu0 0
    %181 = vmatprep.subr.bf16.mxu0 0
    %182 = vmatpush1.bf16.msra.mxu0 0
    %183 = vmatprep.subr.bf16.mxu0 0
    %184 = vmatpush1.bf16.msra.mxu0 0
    %185 = vmatprep.subr.bf16.mxu0 0
    %186 = vmatpush1.bf16.msra.mxu0 0
    %187 = vmatprep.subr.bf16.mxu0 0
    %188 = vmatpush1.bf16.msra.mxu0 0
    %189 = vmatprep.subr.bf16.mxu0 0
    %190 = vmatpush1.bf16.msra.mxu0 0
    %191 = vmatprep.subr.bf16.mxu0 0
    %192 = vmatpush1.bf16.msra.mxu0 0
    %193 = vmatprep.subr.bf16.mxu0 0
    %194 = vmatpush1.bf16.msra.mxu0 0
    %195 = vmatprep.subr.bf16.mxu0 0
    %196 = vmatpush1.bf16.msra.mxu0 0
    %197 = vmatprep.subr.bf16.mxu0 0
    %198 = vmatpush1.bf16.msra.mxu0 0
    %199 = vmatprep.subr.bf16.mxu0 0
    %200 = vmatpush1.bf16.msra.mxu0 0
    %201 = vmatprep.subr.bf16.mxu0 0
    %202 = vmatpush1.bf16.msra.mxu0 0
    %203 = vmatprep.mubr.bf16.mxu0 0
    %204 = vmatmul.mubr.bf16.gmra.mrb[0].mxu0 %v169
    %v205 = vpop.f32.mrb[0].mxu0
    %v206 = vadd.f32 %v150, %v205
    %v207 = vpop.f32.mrb[0].mxu0
    %v208 = vpop.f32.mrb[0].mxu0
    %v209 = vpop.f32.mrb[0].mxu0
    %210 = vdwg.mxu0
    %v211 = vld [vmem:[%s4] sm:$0x1]
    %v213 = vlaneseq
    %v214 = vshrl.u32 %v213, 7
    %v215 = vsub.s32 0, %v214
    %v216 = vrot.slane %v211, %v215
    %v218 = vadd.f32 %v206, %v216
    %v219 = vmax.f32 %v218, 0.0
    %v220 = vpack.c.bf16 %v219, %v219
    %v221 = vld [vmem:[#allocation8] sm:$0xff]
    %v222 = vld [vmem:[#allocation8 + $0x8] sm:$0xff]
    %v223 = vld [vmem:[#allocation8 + $0x10] sm:$0xff]
    %v224 = vld [vmem:[#allocation8 + $0x18] sm:$0xff]
    %v225 = vld [vmem:[#allocation8 + $0x20] sm:$0xff]
    %v226 = vld [vmem:[#allocation8 + $0x28] sm:$0xff]
    %v227 = vld [vmem:[#allocation8 + $0x30] sm:$0xff]
    %v228 = vld [vmem:[#allocation8 + $0x38] sm:$0xff]
    %v229 = vld [vmem:[#allocation8 + $0x40] sm:$0xff]
    %v230 = vld [vmem:[#allocation8 + $0x48] sm:$0xff]
    %v231 = vld [vmem:[#allocation8 + $0x50] sm:$0xff]
    %v232 = vld [vmem:[#allocation8 + $0x58] sm:$0xff]
    %v233 = vld [vmem:[#allocation8 + $0x60] sm:$0xff]
    %v234 = vld [vmem:[#allocation8 + $0x68] sm:$0xff]
    %v235 = vld [vmem:[#allocation8 + $0x70] sm:$0xff]
    %v236 = vld [vmem:[#allocation8 + $0x78] sm:$0xff]
    %v237 = vld [vmem:[%s6] sm:$0x3]
    %v239 = vlaneseq
    %v240 = vshrl.u32 %v239, 7
    %v241 = vsub.s32 0, %v240
    %v242 = vrot.slane %v237, %v241
    %v243 = vlaneseq
    %v244 = vshrl.u32 %v243, 7
    %v245 = vsub.s32 1, %v244
    %v246 = vrot.slane %v237, %v245
    %v265 = vunpack.c.l.b16 %v221
    %v266 = vunpack.c.h.b16 %v221
    %v267 = vunpack.c.l.b16 %v222
    %v268 = vunpack.c.h.b16 %v222
    %v269 = vunpack.c.l.b16 %v223
    %v270 = vunpack.c.h.b16 %v223
    %v271 = vunpack.c.l.b16 %v224
    %v272 = vunpack.c.h.b16 %v224
    %v273 = vunpack.c.l.b16 %v225
    %v274 = vunpack.c.h.b16 %v225
    %v275 = vunpack.c.l.b16 %v226
    %v276 = vunpack.c.h.b16 %v226
    %v277 = vunpack.c.l.b16 %v227
    %v278 = vunpack.c.h.b16 %v227
    %v279 = vunpack.c.l.b16 %v228
    %v280 = vunpack.c.h.b16 %v228
    %v281 = vunpack.c.l.b16 %v229
    %v282 = vunpack.c.h.b16 %v229
    %v283 = vunpack.c.l.b16 %v230
    %v284 = vunpack.c.h.b16 %v230
    %v285 = vunpack.c.l.b16 %v231
    %v286 = vunpack.c.h.b16 %v231
    %v287 = vunpack.c.l.b16 %v232
    %v288 = vunpack.c.h.b16 %v232
    %v289 = vunpack.c.l.b16 %v233
    %v290 = vunpack.c.h.b16 %v233
    %v291 = vunpack.c.l.b16 %v234
    %v292 = vunpack.c.h.b16 %v234
    %v293 = vunpack.c.l.b16 %v235
    %v294 = vunpack.c.h.b16 %v235
    %v295 = vunpack.c.l.b16 %v236
    %v296 = vunpack.c.h.b16 %v236
    %v297 = vpack.c.b16 %v267, %v265
    %v298 = vpack.c.b16 %v268, %v266
    %v299 = vpack.c.b16 %v271, %v269
    %v300 = vpack.c.b16 %v272, %v270
    %v301 = vpack.c.b16 %v275, %v273
    %v302 = vpack.c.b16 %v276, %v274
    %v303 = vpack.c.b16 %v279, %v277
    %v304 = vpack.c.b16 %v280, %v278
    %v305 = vpack.c.b16 %v283, %v281
    %v306 = vpack.c.b16 %v284, %v282
    %v307 = vpack.c.b16 %v287, %v285
    %v308 = vpack.c.b16 %v288, %v286
    %v309 = vpack.c.b16 %v291, %v289
    %v310 = vpack.c.b16 %v292, %v290
    %v311 = vpack.c.b16 %v295, %v293
    %v312 = vpack.c.b16 %v296, %v294
    %329 = vmatprep.subr.bf16.mxu0 %v298
    %330 = vmatpush1.bf16.msra.mxu0 %v297
    %331 = vmatprep.subr.bf16.mxu0 %v300
    %332 = vmatpush1.bf16.msra.mxu0 %v299
    %333 = vmatprep.subr.bf16.mxu0 %v302
    %334 = vmatpush1.bf16.msra.mxu0 %v301
    %335 = vmatprep.subr.bf16.mxu0 %v304
    %336 = vmatpush1.bf16.msra.mxu0 %v303
    %337 = vmatprep.subr.bf16.mxu0 %v306
    %338 = vmatpush1.bf16.msra.mxu0 %v305
    %339 = vmatprep.subr.bf16.mxu0 %v308
    %340 = vmatpush1.bf16.msra.mxu0 %v307
    %341 = vmatprep.subr.bf16.mxu0 %v310
    %342 = vmatpush1.bf16.msra.mxu0 %v309
    %343 = vmatprep.subr.bf16.mxu0 %v312
    %344 = vmatpush1.bf16.msra.mxu0 %v311
    %345 = vmatprep.subr.bf16.mxu0 0
    %346 = vmatpush1.bf16.msra.mxu0 0
    %347 = vmatprep.subr.bf16.mxu0 0
    %348 = vmatpush1.bf16.msra.mxu0 0
    %349 = vmatprep.subr.bf16.mxu0 0
    %350 = vmatpush1.bf16.msra.mxu0 0
    %351 = vmatprep.subr.bf16.mxu0 0
    %352 = vmatpush1.bf16.msra.mxu0 0
    %353 = vmatprep.subr.bf16.mxu0 0
    %354 = vmatpush1.bf16.msra.mxu0 0
    %355 = vmatprep.subr.bf16.mxu0 0
    %356 = vmatpush1.bf16.msra.mxu0 0
    %357 = vmatprep.subr.bf16.mxu0 0
    %358 = vmatpush1.bf16.msra.mxu0 0
    %359 = vmatprep.subr.bf16.mxu0 0
    %360 = vmatpush1.bf16.msra.mxu0 0
    %361 = vmatprep.mubr.bf16.mxu0 0
    %362 = vmatmul.mubr.bf16.gmra.mrb[0].mxu0 %v220
    %v363 = vpop.f32.mrb[0].mxu0
    %v364 = vadd.f32 %v242, %v363
    %v365 = vpop.f32.mrb[0].mxu0
    %v366 = vadd.f32 %v246, %v365
    %v367 = vpop.f32.mrb[0].mxu0
    %v368 = vpop.f32.mrb[0].mxu0
    %369 = vdwg.mxu0
    %v370 = vmax.f32 %v364, 0.0
    %v371 = vmax.f32 %v366, 0.0
    %v372 = vpack.c.bf16 %v370, %v370
    %v373 = vpack.c.bf16 %v371, %v371
    %v374 = vld [vmem:[#allocation10] sm:$0xf]
    %v375 = vld [vmem:[#allocation10 + $0x4] sm:$0xf]
    %v376 = vld [vmem:[#allocation10 + $0x8] sm:$0xf]
    %v377 = vld [vmem:[#allocation10 + $0xc] sm:$0xf]
    %v378 = vld [vmem:[#allocation10 + $0x10] sm:$0xf]
    %v379 = vld [vmem:[#allocation10 + $0x14] sm:$0xf]
    %v380 = vld [vmem:[#allocation10 + $0x18] sm:$0xf]
    %v381 = vld [vmem:[#allocation10 + $0x1c] sm:$0xf]
    %v382 = vld [vmem:[#allocation10 + $0x20] sm:$0xf]
    %v383 = vld [vmem:[#allocation10 + $0x24] sm:$0xf]
    %v384 = vld [vmem:[#allocation10 + $0x28] sm:$0xf]
    %v385 = vld [vmem:[#allocation10 + $0x2c] sm:$0xf]
    %v386 = vld [vmem:[#allocation10 + $0x30] sm:$0xf]
    %v387 = vld [vmem:[#allocation10 + $0x34] sm:$0xf]
    %v388 = vld [vmem:[#allocation10 + $0x38] sm:$0xf]
    %v389 = vld [vmem:[#allocation10 + $0x3c] sm:$0xf]
    %v390 = vld [vmem:[#allocation10 + $0x40] sm:$0xf]
    %v391 = vld [vmem:[#allocation10 + $0x44] sm:$0xf]
    %v392 = vld [vmem:[#allocation10 + $0x48] sm:$0xf]
    %v393 = vld [vmem:[#allocation10 + $0x4c] sm:$0xf]
    %v394 = vld [vmem:[#allocation10 + $0x50] sm:$0xf]
    %v395 = vld [vmem:[#allocation10 + $0x54] sm:$0xf]
    %v396 = vld [vmem:[#allocation10 + $0x58] sm:$0xf]
    %v397 = vld [vmem:[#allocation10 + $0x5c] sm:$0xf]
    %v398 = vld [vmem:[#allocation10 + $0x60] sm:$0xf]
    %v399 = vld [vmem:[#allocation10 + $0x64] sm:$0xf]
    %v400 = vld [vmem:[#allocation10 + $0x68] sm:$0xf]
    %v401 = vld [vmem:[#allocation10 + $0x6c] sm:$0xf]
    %v402 = vld [vmem:[#allocation10 + $0x70] sm:$0xf]
    %v403 = vld [vmem:[#allocation10 + $0x74] sm:$0xf]
    %v404 = vld [vmem:[#allocation10 + $0x78] sm:$0xf]
    %v405 = vld [vmem:[#allocation10 + $0x7c] sm:$0xf]
    %v406 = vld [vmem:[%s8] sm:$0x1]
    %v408 = vlaneseq
    %v409 = vshrl.u32 %v408, 7
    %v410 = vsub.s32 0, %v409
    %v411 = vrot.slane %v406, %v410
    %v445 = vunpack.c.l.b16 %v374
    %v446 = vunpack.c.l.b16 %v375
    %v447 = vunpack.c.l.b16 %v376
    %v448 = vunpack.c.l.b16 %v377
    %v449 = vunpack.c.l.b16 %v378
    %v450 = vunpack.c.l.b16 %v379
    %v451 = vunpack.c.l.b16 %v380
    %v452 = vunpack.c.l.b16 %v381
    %v453 = vunpack.c.l.b16 %v382
    %v454 = vunpack.c.l.b16 %v383
    %v455 = vunpack.c.l.b16 %v384
    %v456 = vunpack.c.l.b16 %v385
    %v457 = vunpack.c.l.b16 %v386
    %v458 = vunpack.c.l.b16 %v387
    %v459 = vunpack.c.l.b16 %v388
    %v460 = vunpack.c.l.b16 %v389
    %v461 = vunpack.c.l.b16 %v390
    %v462 = vunpack.c.l.b16 %v391
    %v463 = vunpack.c.l.b16 %v392
    %v464 = vunpack.c.l.b16 %v393
    %v465 = vunpack.c.l.b16 %v394
    %v466 = vunpack.c.l.b16 %v395
    %v467 = vunpack.c.l.b16 %v396
    %v468 = vunpack.c.l.b16 %v397
    %v469 = vunpack.c.l.b16 %v398
    %v470 = vunpack.c.l.b16 %v399
    %v471 = vunpack.c.l.b16 %v400
    %v472 = vunpack.c.l.b16 %v401
    %v473 = vunpack.c.l.b16 %v402
    %v474 = vunpack.c.l.b16 %v403
    %v475 = vunpack.c.l.b16 %v404
    %v476 = vunpack.c.l.b16 %v405
    %v477 = vpack.c.b16 %v446, %v445
    %v478 = vpack.c.b16 %v448, %v447
    %v479 = vpack.c.b16 %v450, %v449
    %v480 = vpack.c.b16 %v452, %v451
    %v481 = vpack.c.b16 %v454, %v453
    %v482 = vpack.c.b16 %v456, %v455
    %v483 = vpack.c.b16 %v458, %v457
    %v484 = vpack.c.b16 %v460, %v459
    %v485 = vpack.c.b16 %v462, %v461
    %v486 = vpack.c.b16 %v464, %v463
    %v487 = vpack.c.b16 %v466, %v465
    %v488 = vpack.c.b16 %v468, %v467
    %v489 = vpack.c.b16 %v470, %v469
    %v490 = vpack.c.b16 %v472, %v471
    %v491 = vpack.c.b16 %v474, %v473
    %v492 = vpack.c.b16 %v476, %v475
    %509 = vmatprep.subr.bf16.mxu0 0
    %510 = vmatpush1.bf16.msra.mxu0 %v477
    %511 = vmatprep.subr.bf16.mxu0 0
    %512 = vmatpush1.bf16.msra.mxu0 %v478
    %513 = vmatprep.subr.bf16.mxu0 0
    %514 = vmatpush1.bf16.msra.mxu0 %v479
    %515 = vmatprep.subr.bf16.mxu0 0
    %516 = vmatpush1.bf16.msra.mxu0 %v480
    %517 = vmatprep.subr.bf16.mxu0 0
    %518 = vmatpush1.bf16.msra.mxu0 %v481
    %519 = vmatprep.subr.bf16.mxu0 0
    %520 = vmatpush1.bf16.msra.mxu0 %v482
    %521 = vmatprep.subr.bf16.mxu0 0
    %522 = vmatpush1.bf16.msra.mxu0 %v483
    %523 = vmatprep.subr.bf16.mxu0 0
    %524 = vmatpush1.bf16.msra.mxu0 %v484
    %525 = vmatprep.subr.bf16.mxu0 0
    %526 = vmatpush1.bf16.msra.mxu0 %v485
    %527 = vmatprep.subr.bf16.mxu0 0
    %528 = vmatpush1.bf16.msra.mxu0 %v486
    %529 = vmatprep.subr.bf16.mxu0 0
    %530 = vmatpush1.bf16.msra.mxu0 %v487
    %531 = vmatprep.subr.bf16.mxu0 0
    %532 = vmatpush1.bf16.msra.mxu0 %v488
    %533 = vmatprep.subr.bf16.mxu0 0
    %534 = vmatpush1.bf16.msra.mxu0 %v489
    %535 = vmatprep.subr.bf16.mxu0 0
    %536 = vmatpush1.bf16.msra.mxu0 %v490
    %537 = vmatprep.subr.bf16.mxu0 0
    %538 = vmatpush1.bf16.msra.mxu0 %v491
    %539 = vmatprep.subr.bf16.mxu0 0
    %540 = vmatpush1.bf16.msra.mxu0 %v492
    %541 = vmatprep.mubr.bf16.mxu0 %v373
    %542 = vmatmul.mubr.bf16.gmra.mrb[0].mxu0 %v372
    %v543 = vpop.f32.mrb[0].mxu0
    %v544 = vadd.f32 %v411, %v543
    %v545 = vpop.f32.mrb[0].mxu0
    %v546 = vpop.f32.mrb[0].mxu0
    %v547 = vpop.f32.mrb[0].mxu0
    %548 = vdwg.mxu0
    %v549 = vtanh.pop %v544
    %550 = vst [vmem:[#allocation11] sm:$0xff] %v549
    // Predicated region
    $region58: #{tpu_custom_call.1} parent=1 // pred_check
      _
    $region59: #{tpu_custom_call.1} parent=1 // pred_check_branch
      %552 = sbr.rel (0) target = $region61
    $region60: #{tpu_custom_call.1} parent=1 // pred_region
      %s554 = ssub.s32 128, 128
      %555 = vsyncadd [#allocation4], %s554
      %s557 = sshll.u32 [#allocation11], 4
      %s558 = int_to_ptr.vmem [resolvable:$true] %s557
      %560 = dma.vmem_to_hbm [thread:$0]  %s558, 128, %s9, [#allocation4]
    $region61: #{tpu_custom_call.1} parent=1 // pred_fallthru
      _
    // Predicated region
    $region62: #{tpu_custom_call.1} parent=1 // pred_check
      _
    $region63: #{tpu_custom_call.1} parent=1 // pred_check_branch
      %562 = sbr.rel (0) target = $region65
    $region64: #{tpu_custom_call.1} parent=1 // pred_region
      %563 = dma.done [#allocation4], 128
    $region65: #{tpu_custom_call.1} parent=1 // pred_fallthru
      _
    %564 = vsyncpa [#allocation3], 1
    %565 = vsyncpa [#allocation6], 1
    %566 = vsyncpa [#allocation9], 1
    %567 = vsyncpa [#allocation4], 1

</llo_original>
